<compile_context>
chip_gen: v7x
topology: tpu7x:2x2x1
jax: 0.10.0
libtpu: 0.0.40
codegen_flags: <defaults>
</compile_context>

<pallas_src>
import jax
import jax.numpy as jnp
from jax.experimental import pallas as pl
from jax.experimental.pallas import tpu as pltpu


# ----------------------------- fused SELayer kernel -----------------------------

def _se_kernel(x_ref, w1_ref, w2_ref, o_ref, cw_ref):
    """x_ref: (bt, C, HW) f32 (spatial in lanes).  One grid step = bt batch rows.

    AdaptiveAvgPool2d(1) -> Linear(C, C//r, no bias) -> ReLU -> Linear(C//r, C, no bias)
    -> Sigmoid -> x * y.expand_as(x).  Rows are independent, so padded rows of a partial
    final batch block cannot corrupt valid rows (their stores are masked off).
    """
    x = x_ref[...]                                                  # (bt, C, HW)
    y = jnp.mean(x, axis=-1)                                        # (bt, C)  avg pool (XLU)
    z = jnp.maximum(jnp.dot(y, w1_ref[...],
                            preferred_element_type=jnp.float32), 0.0)
    s = jax.nn.sigmoid(jnp.dot(z, w2_ref[...],
                               preferred_element_type=jnp.float32))  # (bt, C)
    cw_ref[...] = s                                                 # module's self.weights stash
    o_ref[...] = x * s[:, :, None]                                  # channel-wise scale


def se_layer(x_nchw, w1, w2, *, block_b=None, vmem_budget_bytes=8 << 20):
    """Faithful SELayer.forward for NCHW input.

    w1: (C, C//r)  -- torch fc[0].weight transposed
    w2: (C//r, C)  -- torch fc[2].weight transposed
    Returns (scaled_x_nchw, channel_weights[B, C]).
    """
    B, C, H, W = x_nchw.shape
    HW = H * W
    Cr = w1.shape[1]
    assert w1.shape == (C, Cr) and w2.shape == (Cr, C)

    if block_b is None:
        per_b = C * HW * 4 * 4               # x + out, double-buffered, f32
        block_b = min(B, max(1, vmem_budget_bytes // max(per_b, 1)))
        if block_b < B:                      # keep the (bt, C) weights-block sublane dim 8-aligned
            block_b = max(8, (block_b // 8) * 8)
    block_b = min(block_b, B)
    grid = (pl.cdiv(B, block_b),)

    x3 = x_nchw.reshape(B, C, HW).astype(jnp.float32)   # contiguous reshape, no transpose

    out, cw = pl.pallas_call(
        _se_kernel,
        out_shape=(jax.ShapeDtypeStruct((B, C, HW), jnp.float32),
                   jax.ShapeDtypeStruct((B, C), jnp.float32)),
        grid=grid,
        in_specs=[
            pl.BlockSpec((block_b, C, HW), lambda b: (b, 0, 0)),   # activations: batch-tiled
            pl.BlockSpec((C, Cr), lambda b: (0, 0)),               # fc1 weight (tiny, resident)
            pl.BlockSpec((Cr, C), lambda b: (0, 0)),               # fc2 weight (tiny, resident)
        ],
        out_specs=(
            pl.BlockSpec((block_b, C, HW), lambda b: (b, 0, 0)),   # scaled x (lane-dense in HW)
            pl.BlockSpec((block_b, C), lambda b: (b, 0)),          # channel weights
        ),
        compiler_params=pltpu.CompilerParams(dimension_semantics=("parallel",)),
    )(x3, w1.astype(jnp.float32), w2.astype(jnp.float32))

    return out.reshape(B, C, H, W), cw


# --------------------------------- reference ------------------------------------

def _se_ref(x, w1, w2):
    y = jnp.mean(x, axis=(2, 3))
    s = jax.nn.sigmoid(jnp.maximum(y @ w1, 0.0) @ w2)
    return x * s[:, :, None, None], s


# ----------------------------------- main ----------------------------------------

if __name__ == "__main__":
    key = jax.random.PRNGKey(0)

    def check(B, C, H, W, reduction, k, block_b=None):
        kx, k1, k2 = jax.random.split(k, 3)
        Cr = C // reduction
        x = jax.random.normal(kx, (B, C, H, W), dtype=jnp.float32)
        w1 = 0.3 * jax.random.normal(k1, (C, Cr), dtype=jnp.float32)
        w2 = 0.3 * jax.random.normal(k2, (Cr, C), dtype=jnp.float32)

        fwd = jax.jit(lambda a, b, c: se_layer(a, b, c, block_b=block_b))
        out, cw = jax.block_until_ready(fwd(x, w1, w2))
        ref_out, ref_cw = _se_ref(x, w1, w2)

        assert out.shape == x.shape and cw.shape == (B, C)
        assert bool(jnp.all(jnp.isfinite(out)))
        assert bool(jnp.allclose(out, ref_out, atol=1e-5, rtol=1e-5))
        assert bool(jnp.allclose(cw, ref_cw, atol=1e-5, rtol=1e-5))

    k0, k1, k2 = jax.random.split(key, 3)
    # channels=10 so channel // reduction(=5) = 2, as the module's fc implies; HW=256 is lane-dense.
    check(2, 10, 16, 16, 5, k0)               # small case: single grid step
    check(4, 20, 7, 7, 5, k1)                 # odd spatial size (masked lanes), C//5 = 4
    check(16, 10, 16, 16, 5, k2, block_b=8)   # forced batch tiling: grid=(2,), block (8, C, HW)

    print("KERNEL_OK")
</pallas_src>

<mosaic_0001>
module attributes {stable_mosaic.version = 11 : i64} {
  func.func @_se_kernel(%arg0: i32, %arg1: memref<2x10x256xf32, #tpu.memory_space<vmem>>, %arg2: memref<10x2xf32, #tpu.memory_space<vmem>>, %arg3: memref<2x10xf32, #tpu.memory_space<vmem>>, %arg4: memref<2x10x256xf32, #tpu.memory_space<vmem>>, %arg5: memref<2x10xf32, #tpu.memory_space<vmem>>) attributes {dimension_semantics = [#tpu.dimension_semantics<parallel>], iteration_bounds = array<i64: 1>, scalar_prefetch = 0 : i64, scratch_operands = 0 : i64, tpu.core_type = #tpu.core_type<tc>, window_params = [{transform_indices = @transform_0, window_bounds = array<i64: 2, 10, 256>}, {pipeline_mode = #tpu.pipeline_mode<synchronous>, transform_indices = @transform_1, window_bounds = array<i64: 10, 2>}, {pipeline_mode = #tpu.pipeline_mode<synchronous>, transform_indices = @transform_2, window_bounds = array<i64: 2, 10>}, {transform_indices = @transform_3, window_bounds = array<i64: 2, 10, 256>}, {transform_indices = @transform_4, window_bounds = array<i64: 2, 10>}]} {
    %c0 = arith.constant 0 : index
    %c0_0 = arith.constant 0 : index
    %c0_1 = arith.constant 0 : index
    %0 = vector.load %arg1[%c0, %c0_0, %c0_1] : memref<2x10x256xf32, #tpu.memory_space<vmem>>, vector<2x10x256xf32>
    %cst = arith.constant dense<0.000000e+00> : vector<2x10xf32>
    %1 = vector.multi_reduction <add>, %0, %cst [2] : vector<2x10x256xf32> to vector<2x10xf32>
    %cst_2 = arith.constant 2.560000e+02 : f32
    %2 = vector.broadcast %cst_2 : f32 to vector<2x10xf32>
    %3 = arith.divf %1, %2 : vector<2x10xf32>
    %c0_3 = arith.constant 0 : index
    %c0_4 = arith.constant 0 : index
    %4 = vector.load %arg2[%c0_3, %c0_4] : memref<10x2xf32, #tpu.memory_space<vmem>>, vector<10x2xf32>
    %cst_5 = arith.constant dense<0.000000e+00> : vector<2x2xf32>
    %5 = tpu.matmul %3, %4, %cst_5 {dimension_numbers = #tpu.dot_dimension_numbers<[1], [0], [0], [1], [0, 0, 1, 1], [], []>} : vector<2x10xf32>, vector<10x2xf32>, vector<2x2xf32> -> vector<2x2xf32>
    %cst_6 = arith.constant 0.000000e+00 : f32
    %6 = vector.broadcast %cst_6 : f32 to vector<2x2xf32>
    %7 = arith.maximumf %5, %6 : vector<2x2xf32>
    %c0_7 = arith.constant 0 : index
    %c0_8 = arith.constant 0 : index
    %8 = vector.load %arg3[%c0_7, %c0_8] : memref<2x10xf32, #tpu.memory_space<vmem>>, vector<2x10xf32>
    %cst_9 = arith.constant dense<0.000000e+00> : vector<2x10xf32>
    %9 = tpu.matmul %7, %8, %cst_9 {dimension_numbers = #tpu.dot_dimension_numbers<[1], [0], [0], [1], [0, 0, 1, 1], [], []>} : vector<2x2xf32>, vector<2x10xf32>, vector<2x10xf32> -> vector<2x10xf32>
    %10 = arith.negf %9 : vector<2x10xf32>
    %11 = math.exp %10 : vector<2x10xf32>
    %cst_10 = arith.constant 1.000000e+00 : f32
    %12 = vector.broadcast %cst_10 : f32 to vector<2x10xf32>
    %13 = arith.addf %12, %11 : vector<2x10xf32>
    %14 = arith.divf %12, %13 : vector<2x10xf32>
    %c0_11 = arith.constant 0 : index
    %c0_12 = arith.constant 0 : index
    %15 = vector.load %arg5[%c0_11, %c0_12] : memref<2x10xf32, #tpu.memory_space<vmem>>, vector<2x10xf32>
    tpu.vector_store %arg5[%c0_11, %c0_12], %14 {strides = array<i32>} : memref<2x10xf32, #tpu.memory_space<vmem>>, vector<2x10xf32>,
    %16 = vector.shape_cast %14 : vector<2x10xf32> to vector<2x10x1xf32>
    %17 = vector.broadcast %16 : vector<2x10x1xf32> to vector<2x10x256xf32>
    %18 = arith.mulf %0, %17 : vector<2x10x256xf32>
    %c0_13 = arith.constant 0 : index
    %c0_14 = arith.constant 0 : index
    %c0_15 = arith.constant 0 : index
    %19 = vector.load %arg4[%c0_13, %c0_14, %c0_15] : memref<2x10x256xf32, #tpu.memory_space<vmem>>, vector<2x10x256xf32>
    tpu.vector_store %arg4[%c0_13, %c0_14, %c0_15], %18 {strides = array<i32>} : memref<2x10x256xf32, #tpu.memory_space<vmem>>, vector<2x10x256xf32>,
    return
  }
  func.func @transform_0(%arg0: i32) -> (i32, i32, i32) {
    %c0_i32 = arith.constant 0 : i32
    %c0_i32_0 = arith.constant 0 : i32
    %c0_i32_1 = arith.constant 0 : i32
    return %arg0, %c0_i32, %c0_i32_0 : i32, i32, i32
  }
  func.func @transform_1(%arg0: i32) -> (i32, i32) {
    %c0_i32 = arith.constant 0 : i32
    %c0_i32_0 = arith.constant 0 : i32
    %c0_i32_1 = arith.constant 0 : i32
    return %c0_i32, %c0_i32_0 : i32, i32
  }
  func.func @transform_2(%arg0: i32) -> (i32, i32) {
    %c0_i32 = arith.constant 0 : i32
    %c0_i32_0 = arith.constant 0 : i32
    %c0_i32_1 = arith.constant 0 : i32
    return %c0_i32, %c0_i32_0 : i32, i32
  }
  func.func @transform_3(%arg0: i32) -> (i32, i32, i32) {
    %c0_i32 = arith.constant 0 : i32
    %c0_i32_0 = arith.constant 0 : i32
    %c0_i32_1 = arith.constant 0 : i32
    return %arg0, %c0_i32, %c0_i32_0 : i32, i32, i32
  }
  func.func @transform_4(%arg0: i32) -> (i32, i32) {
    %c0_i32 = arith.constant 0 : i32
    %c0_i32_0 = arith.constant 0 : i32
    return %arg0, %c0_i32 : i32, i32
  }
}

</mosaic_0001>

<llo_original>
// kernel: _lambda_.1
$region0: #{_lambda_.1}
  #allocation0 [shape = 'u32[]', space=smem, size = 0x4, offset = 0x4, fixed_abs, tag = 'smem constant byte address 0x4 - core index']
  #allocation1 [shape = 'u32[144,128]{1,0:T(1,128)}', space=vmem, size = 0x12000, scoped, tag = 'internal scratch']
  %s0 = inlined_call_operand.vmem [shape: f32[2,10,256], index: 0, kind: input, shape index: {}]
  %s1 = inlined_call_operand.vmem [shape: f32[10,2], index: 1, kind: input, shape index: {}]
  %s2 = inlined_call_operand.vmem [shape: f32[2,10], index: 2, kind: input, shape index: {}]
  %s3 = inlined_call_operand.vmem [shape: f32[2,10,256], index: 3, kind: output, shape index: {0}]
  %s4 = inlined_call_operand.hbm [shape: f32[2,10], index: 4, kind: output, shape index: {1}]
  %5 = xla_tuple %s3, %s4
  %s6 = sld [smem:[#allocation0]]
  $region30: #{_lambda_.1} parent=0
    _
  %s8 = ssub.s32 1, %s6
  %s9 = scalar_select 0, %s8, %s6
  $region1: #{_lambda_.1} parent=0
    #allocation2 [shape = 'u8[1024]{0}', space=vmem, size = 0x400, scoped, tag = 'output window, operand 1, single buffered']
    #allocation3 [shape = 's32[1]{0}', space=sflag, size = 0x4, scoped, tag = 'scoped memory for _lambda_.1']
    %10 = vsyncpa [#allocation3], 0
    // Predicated region
    $region2: #{_lambda_.1} parent=1 // pred_check
      _
    $region3: #{_lambda_.1} parent=1 // pred_check_branch
      %12 = sbr.rel (0) target = $region5
    $region4: #{_lambda_.1} parent=1 // pred_region
      _
    $region5: #{_lambda_.1} parent=1 // pred_fallthru
      _
    // Predicated region
    $region6: #{_lambda_.1} parent=1 // pred_check
      _
    $region7: #{_lambda_.1} parent=1 // pred_check_branch
      %14 = sbr.rel (0) target = $region9
    $region8: #{_lambda_.1} parent=1 // pred_region
      _
    $region9: #{_lambda_.1} parent=1 // pred_fallthru
      _
    // Predicated region
    $region10: #{_lambda_.1} parent=1 // pred_check
      _
    $region11: #{_lambda_.1} parent=1 // pred_check_branch
      %16 = sbr.rel (0) target = $region13
    $region12: #{_lambda_.1} parent=1 // pred_region
      _
    $region13: #{_lambda_.1} parent=1 // pred_fallthru
      _
    %v17 = vld [vmem:[%s0] sm:$0xff]
    %v18 = vld [vmem:[%s0 + $0x8] sm:$0xff]
    %v19 = vld [vmem:[%s0 + $0x10] sm:$0x3]
    %v20 = vld [vmem:[%s0 + $0x18] sm:$0x3]
    %v21 = vld [vmem:[%s0 + $0x20] sm:$0xff]
    %v22 = vld [vmem:[%s0 + $0x28] sm:$0xff]
    %v23 = vld [vmem:[%s0 + $0x30] sm:$0x3]
    %v24 = vld [vmem:[%s0 + $0x38] sm:$0x3]
    %v25 = vadd.f32 %v17, %v18
    %26 = vadd.xlane.f32.xlu0 %v25
    %v27 = vpop.xlane.xlu0 %26
    %vm28 = vcmask 1041408
    %v29 = vsel %vm28, %v19, 0.0
    %v30 = vsel %vm28, %v20, 0.0
    %v31 = vadd.f32 %v29, %v30
    %32 = vadd.xlane.f32.xlu0 %v31
    %v33 = vpop.xlane.xlu0 %32
    %v34 = vadd.f32 %v21, %v22
    %35 = vadd.xlane.f32.xlu0 %v34
    %v36 = vpop.xlane.xlu0 %35
    %v37 = vsel %vm28, %v23, 0.0
    %v38 = vsel %vm28, %v24, 0.0
    %v39 = vadd.f32 %v37, %v38
    %40 = vadd.xlane.f32.xlu0 %v39
    %v41 = vpop.xlane.xlu0 %40
    %v42 = vrcp.pop 256.0
    %v43 = vmul.f32 %v27, %v42
    %v44 = vmul.f32 %v33, %v42
    %v45 = vmul.f32 %v36, %v42
    %v46 = vmul.f32 %v41, %v42
    %v47 = vld [vmem:[%s1] sm:$0xff]
    %v48 = vld [vmem:[%s1 + $0x8] sm:$0x3]
    %v53 = vlaneseq
    %v54 = vand.u32 %v53, 127
    %v55 = vlaneseq
    %v56 = vshrl.u32 %v55, 7
    %v57 = vsub.s32 %v54, %v56
    %v58 = vrot.slane %v43, %v57
    %v59 = vadd.s32 %v54, 4294967288
    %v60 = vlaneseq
    %v61 = vshrl.u32 %v60, 7
    %v62 = vsub.s32 %v59, %v61
    %v63 = vrot.slane %v44, %v62
    %vm64 = vcmask 130112
    %v65 = vsel %vm64, %v63, %v58
    %v66 = vlaneseq
    %v67 = vshrl.u32 %v66, 7
    %v68 = vsub.s32 %v54, %v67
    %v69 = vrot.slane %v45, %v68
    %v70 = vlaneseq
    %v71 = vshrl.u32 %v70, 7
    %v72 = vsub.s32 %v59, %v71
    %v73 = vrot.slane %v46, %v72
    %v74 = vsel %vm64, %v73, %v69
    %vm75 = vcmask 1041409
    %v76 = vsel %vm75, %v74, %v65
    %vm77 = vcmask 80896
    %v78 = vsel %vm77, %v76, 0
    %v81 = vsel %vm28, %v48, 0
    %83 = vmatprep.subr.mxu0 0.0
    %84 = vmatpush1.msra.mxu0 %v47
    %85 = vmatprep.subr.mxu0 0.0
    %86 = vmatpush1.msra.mxu0 %v81
    %87 = vmatprep.subr.mxu0 0.0
    %88 = vmatpush1.msra.mxu0 0.0
    %89 = vmatprep.subr.mxu0 0.0
    %90 = vmatpush1.msra.mxu0 0.0
    %91 = vmatprep.subr.mxu0 0.0
    %92 = vmatpush1.msra.mxu0 0.0
    %93 = vmatprep.subr.mxu0 0.0
    %94 = vmatpush1.msra.mxu0 0.0
    %95 = vmatprep.subr.mxu0 0.0
    %96 = vmatpush1.msra.mxu0 0.0
    %97 = vmatprep.subr.mxu0 0.0
    %98 = vmatpush1.msra.mxu0 0.0
    %99 = vmatprep.subr.mxu0 0.0
    %100 = vmatpush1.msra.mxu0 0.0
    %101 = vmatprep.subr.mxu0 0.0
    %102 = vmatpush1.msra.mxu0 0.0
    %103 = vmatprep.subr.mxu0 0.0
    %104 = vmatpush1.msra.mxu0 0.0
    %105 = vmatprep.subr.mxu0 0.0
    %106 = vmatpush1.msra.mxu0 0.0
    %107 = vmatprep.subr.mxu0 0.0
    %108 = vmatpush1.msra.mxu0 0.0
    %109 = vmatprep.subr.mxu0 0.0
    %110 = vmatpush1.msra.mxu0 0.0
    %111 = vmatprep.subr.mxu0 0.0
    %112 = vmatpush1.msra.mxu0 0.0
    %113 = vmatprep.subr.mxu0 0.0
    %114 = vmatpush1.msra.mxu0 0.0
    %115 = vmatprep.subr.mxu0 0.0
    %116 = vmatpush1.msra.mxu0 0.0
    %117 = vmatprep.subr.mxu0 0.0
    %118 = vmatpush1.msra.mxu0 0.0
    %119 = vmatprep.subr.mxu0 0.0
    %120 = vmatpush1.msra.mxu0 0.0
    %121 = vmatprep.subr.mxu0 0.0
    %122 = vmatpush1.msra.mxu0 0.0
    %123 = vmatprep.subr.mxu0 0.0
    %124 = vmatpush1.msra.mxu0 0.0
    %125 = vmatprep.subr.mxu0 0.0
    %126 = vmatpush1.msra.mxu0 0.0
    %127 = vmatprep.subr.mxu0 0.0
    %128 = vmatpush1.msra.mxu0 0.0
    %129 = vmatprep.subr.mxu0 0.0
    %130 = vmatpush1.msra.mxu0 0.0
    %131 = vmatprep.subr.mxu0 0.0
    %132 = vmatpush1.msra.mxu0 0.0
    %133 = vmatprep.subr.mxu0 0.0
    %134 = vmatpush1.msra.mxu0 0.0
    %135 = vmatprep.subr.mxu0 0.0
    %136 = vmatpush1.msra.mxu0 0.0
    %137 = vmatprep.subr.mxu0 0.0
    %138 = vmatpush1.msra.mxu0 0.0
    %139 = vmatprep.subr.mxu0 0.0
    %140 = vmatpush1.msra.mxu0 0.0
    %141 = vmatprep.subr.mxu0 0.0
    %142 = vmatpush1.msra.mxu0 0.0
    %143 = vmatprep.subr.mxu0 0.0
    %144 = vmatpush1.msra.mxu0 0.0
    %145 = vmatprep.subr.mxu0 0.0
    %146 = vmatpush1.msra.mxu0 0.0
    %147 = vmatprep.mubr.f32.mxu0 0.0
    %148 = vmatmul.mubr.f32.gmra.mrb[0].mxu0 %v78
    %v149 = vpop.f32.mrb[0].mxu0
    %v150 = vadd.f32 0.0, %v149
    %v151 = vpop.f32.mrb[0].mxu0
    %152 = vdwg.mxu0
    %v153 = vmax.f32 %v150, 0.0
    %v154 = vld [vmem:[%s2] sm:$0x3]
    %vm155 = vcmask 15360
    %v157 = vsel %vm155, %v153, 0
    %v160 = vsel %vm28, %v154, 0
    %162 = vmatprep.subr.mxu0 0.0
    %163 = vmatpush1.msra.mxu0 %v160
    %164 = vmatprep.subr.mxu0 0.0
    %165 = vmatpush1.msra.mxu0 0.0
    %166 = vmatprep.subr.mxu0 0.0
    %167 = vmatpush1.msra.mxu0 0.0
    %168 = vmatprep.subr.mxu0 0.0
    %169 = vmatpush1.msra.mxu0 0.0
    %170 = vmatprep.subr.mxu0 0.0
    %171 = vmatpush1.msra.mxu0 0.0
    %172 = vmatprep.subr.mxu0 0.0
    %173 = vmatpush1.msra.mxu0 0.0
    %174 = vmatprep.subr.mxu0 0.0
    %175 = vmatpush1.msra.mxu0 0.0
    %176 = vmatprep.subr.mxu0 0.0
    %177 = vmatpush1.msra.mxu0 0.0
    %178 = vmatprep.subr.mxu0 0.0
    %179 = vmatpush1.msra.mxu0 0.0
    %180 = vmatprep.subr.mxu0 0.0
    %181 = vmatpush1.msra.mxu0 0.0
    %182 = vmatprep.subr.mxu0 0.0
    %183 = vmatpush1.msra.mxu0 0.0
    %184 = vmatprep.subr.mxu0 0.0
    %185 = vmatpush1.msra.mxu0 0.0
    %186 = vmatprep.subr.mxu0 0.0
    %187 = vmatpush1.msra.mxu0 0.0
    %188 = vmatprep.subr.mxu0 0.0
    %189 = vmatpush1.msra.mxu0 0.0
    %190 = vmatprep.subr.mxu0 0.0
    %191 = vmatpush1.msra.mxu0 0.0
    %192 = vmatprep.subr.mxu0 0.0
    %193 = vmatpush1.msra.mxu0 0.0
    %194 = vmatprep.subr.mxu0 0.0
    %195 = vmatpush1.msra.mxu0 0.0
    %196 = vmatprep.subr.mxu0 0.0
    %197 = vmatpush1.msra.mxu0 0.0
    %198 = vmatprep.subr.mxu0 0.0
    %199 = vmatpush1.msra.mxu0 0.0
    %200 = vmatprep.subr.mxu0 0.0
    %201 = vmatpush1.msra.mxu0 0.0
    %202 = vmatprep.subr.mxu0 0.0
    %203 = vmatpush1.msra.mxu0 0.0
    %204 = vmatprep.subr.mxu0 0.0
    %205 = vmatpush1.msra.mxu0 0.0
    %206 = vmatprep.subr.mxu0 0.0
    %207 = vmatpush1.msra.mxu0 0.0
    %208 = vmatprep.subr.mxu0 0.0
    %209 = vmatpush1.msra.mxu0 0.0
    %210 = vmatprep.subr.mxu0 0.0
    %211 = vmatpush1.msra.mxu0 0.0
    %212 = vmatprep.subr.mxu0 0.0
    %213 = vmatpush1.msra.mxu0 0.0
    %214 = vmatprep.subr.mxu0 0.0
    %215 = vmatpush1.msra.mxu0 0.0
    %216 = vmatprep.subr.mxu0 0.0
    %217 = vmatpush1.msra.mxu0 0.0
    %218 = vmatprep.subr.mxu0 0.0
    %219 = vmatpush1.msra.mxu0 0.0
    %220 = vmatprep.subr.mxu0 0.0
    %221 = vmatpush1.msra.mxu0 0.0
    %222 = vmatprep.subr.mxu0 0.0
    %223 = vmatpush1.msra.mxu0 0.0
    %224 = vmatprep.subr.mxu0 0.0
    %225 = vmatpush1.msra.mxu0 0.0
    %226 = vmatprep.mubr.f32.mxu0 0.0
    %227 = vmatmul.mubr.f32.gmra.mrb[0].mxu0 %v157
    %v228 = vpop.f32.mrb[0].mxu0
    %v229 = vadd.f32 0.0, %v228
    %v230 = vpop.f32.mrb[0].mxu0
    %231 = vdwg.mxu0
    %v232 = vxor.u32 %v229, 2147483648
    %v233 = vmul.f32 %v232, 1.442695
    %v234 = vpow.pop %v233
    %v235 = vadd.f32 %v234, 1.0
    %v236 = vrcp.pop %v235
    %v237 = vmul.f32 1.0, %v236
    %vm238 = vcmask 74752
    %239 = vst.msk [vmem:[#allocation2] sm:$0x3] %vm238, %v237
    %v240 = vlaneseq
    %v241 = vshrl.u32 %v240, 7
    %v242 = vsub.s32 0, %v241
    %v243 = vrot.slane %v237, %v242
    %245 = vbcast.lane.b32.xlu0 %v243, 256
    %v246 = vpop.permute.xlu0 %245
    %s248 = sor.u32 256, 8
    %249 = vbcast.lane.b32.xlu0 %v243, %s248
    %v250 = vpop.permute.xlu0 %249
    %v251 = vlaneseq
    %v252 = vshrl.u32 %v251, 7
    %v253 = vsub.s32 1, %v252
    %v254 = vrot.slane %v237, %v253
    %256 = vbcast.lane.b32.xlu0 %v254, 256
    %v257 = vpop.permute.xlu0 %256
    %s259 = sor.u32 256, 8
    %260 = vbcast.lane.b32.xlu0 %v254, %s259
    %v261 = vpop.permute.xlu0 %260
    %v262 = vmul.f32 %v17, %v246
    %v263 = vmul.f32 %v18, %v246
    %v264 = vmul.f32 %v19, %v250
    %v265 = vmul.f32 %v20, %v250
    %v266 = vmul.f32 %v21, %v257
    %v267 = vmul.f32 %v22, %v257
    %v268 = vmul.f32 %v23, %v261
    %v269 = vmul.f32 %v24, %v261
    %270 = vst [vmem:[%s3] sm:$0xff] %v262
    %271 = vst [vmem:[%s3 + $0x8] sm:$0xff] %v263
    %272 = vst [vmem:[%s3 + $0x10] sm:$0x3] %v264
    %273 = vst [vmem:[%s3 + $0x18] sm:$0x3] %v265
    %274 = vst [vmem:[%s3 + $0x20] sm:$0xff] %v266
    %275 = vst [vmem:[%s3 + $0x28] sm:$0xff] %v267
    %276 = vst [vmem:[%s3 + $0x30] sm:$0x3] %v268
    %277 = vst [vmem:[%s3 + $0x38] sm:$0x3] %v269
    // Predicated region
    $region14: #{_lambda_.1} parent=1 // pred_check
      _
    $region15: #{_lambda_.1} parent=1 // pred_check_branch
      %279 = sbr.rel (0) target = $region17
    $region16: #{_lambda_.1} parent=1 // pred_region
      _
    $region17: #{_lambda_.1} parent=1 // pred_fallthru
      _
    // Predicated region
    $region18: #{_lambda_.1} parent=1 // pred_check
      _
    $region19: #{_lambda_.1} parent=1 // pred_check_branch
      %281 = sbr.rel (0) target = $region21
    $region20: #{_lambda_.1} parent=1 // pred_region
      %s283 = ssub.s32 32, 32
      %284 = vsyncadd [#allocation3], %s283
      %s286 = sshll.u32 [#allocation2], 4
      %s287 = int_to_ptr.vmem [resolvable:$true] %s286
      %289 = dma.vmem_to_hbm [thread:$0]  %s287, 32, %s4, [#allocation3]
    $region21: #{_lambda_.1} parent=1 // pred_fallthru
      _
    // Predicated region
    $region22: #{_lambda_.1} parent=1 // pred_check
      _
    $region23: #{_lambda_.1} parent=1 // pred_check_branch
      %291 = sbr.rel (0) target = $region25
    $region24: #{_lambda_.1} parent=1 // pred_region
      _
    $region25: #{_lambda_.1} parent=1 // pred_fallthru
      _
    // Predicated region
    $region26: #{_lambda_.1} parent=1 // pred_check
      _
    $region27: #{_lambda_.1} parent=1 // pred_check_branch
      %293 = sbr.rel (0) target = $region29
    $region28: #{_lambda_.1} parent=1 // pred_region
      %294 = dma.done [#allocation3], 32
    $region29: #{_lambda_.1} parent=1 // pred_fallthru
      _
    %295 = vsyncpa [#allocation3], 1

</llo_original>
